<compile_context>
chip_gen: v7x
topology: tpu7x:2x2x1
jax: 0.10.0
libtpu: 0.0.40
codegen_flags: <defaults>
</compile_context>

<pallas_src>
from functools import partial

import jax
import jax.numpy as jnp
from jax.experimental import pallas as pl
from jax.experimental.pallas import tpu as pltpu

NEG_SLOPE = 0.2
BN_EPS = 1e-5

# rows of the packed parameter array `pvec` (each row zero-padded to P lanes)
(ROW_B0, ROW_B1, ROW_G1, ROW_BE1, ROW_B2, ROW_G2, ROW_BE2,
 ROW_B3, ROW_B4, ROW_B5, ROW_B6, ROW_B7) = range(12)


def _lrelu(x):
    return jnp.where(x >= 0, x, NEG_SLOPE * x)


def fbnetgen_predictor_kernel(B, R, mm_dtype,
                              m_ref, nf_ref,
                              w0_ref, w1_ref, w2_ref, w3_ref, w4_ref,
                              w5_ref, w6_ref, w7_ref,
                              pvec_ref, gcol_ref,
                              out_ref, y_scr):
    def prow(idx, n):                       # packed (1, n) row-vector param
        return pvec_ref[idx:idx + 1, 0:n]

    def mm(x, w_ref):                       # MXU matmul, f32 accumulate
        return jnp.dot(x.astype(mm_dtype), w_ref[...].astype(mm_dtype),
                       preferred_element_type=jnp.float32)

    def bn_rows(x, gamma, beta):
        # training-mode BatchNorm1d over the stacked (B*R, C) rows
        mean = jnp.mean(x, axis=0, keepdims=True)               # (1, C)
        d = x - mean
        var = jnp.mean(d * d, axis=0, keepdims=True)            # biased, centered
        return d * jax.lax.rsqrt(var + BN_EPS) * gamma + beta

    # einsum('ijk,ijp->ijp', m, x): scale ROI row j by sum_k m[b, j, k].
    # Depends only on m -> computed once, reused by all three blocks.
    rs = jnp.sum(m_ref[...], axis=1, keepdims=True)             # (B*R, 1)

    # ---- block 1: einsum-scale -> gcn (Linear -> LReLU -> Linear) -> bn1 ----
    x = rs * nf_ref[...]                                         # (B*R, Din)
    x = _lrelu(mm(x, w0_ref) + prow(ROW_B0, R))
    x = mm(x, w1_ref) + prow(ROW_B1, R)                          # (B*R, R)
    x = bn_rows(x, prow(ROW_G1, R), prow(ROW_BE1, R))

    # ---- block 2: einsum-scale -> gcn1 (Linear -> LReLU) -> bn2 ----
    x = rs * x
    x = _lrelu(mm(x, w2_ref) + prow(ROW_B2, R))
    x = bn_rows(x, prow(ROW_G2, R), prow(ROW_BE2, R))

    # ---- block 3: einsum-scale -> gcn2 (Linear->LReLU->Linear->LReLU) ----
    x = rs * x
    x = _lrelu(mm(x, w3_ref) + prow(ROW_B3, 64))                 # (B*R, 64)
    x = _lrelu(mm(x, w4_ref) + prow(ROW_B4, 8))                  # (B*R, 8)

    # ---- bn3: BatchNorm1d(R) on (B, R, 8): per-ROI stats over (batch, feat) ----
    x3 = x.reshape(B, R, 8)                    # leading-dim split, lane dim unchanged
    s1 = jnp.sum(x3, axis=2, keepdims=True)                      # (B, R, 1)
    mean = jnp.sum(s1, axis=0, keepdims=True) / (B * 8.0)        # (1, R, 1)
    d = x3 - mean
    v1 = jnp.sum(d * d, axis=2, keepdims=True)
    var = jnp.sum(v1, axis=0, keepdims=True) / (B * 8.0)
    inv = jax.lax.rsqrt(var + BN_EPS)
    g3 = gcol_ref[:, 0:1]                                        # (R, 1)
    be3 = gcol_ref[:, 1:2]                                       # (R, 1)
    y_scr[...] = d * inv * g3 + be3                              # (B, R, 8) in VMEM

    # ---- flatten to the lane-dense (B, R*8) activation (stays in VMEM) ----
    # sublane->lane relayout done through the VMEM scratch; ROI r occupies
    # columns r*8:(r+1)*8, matching torch's .view(bz, -1) ordering.
    flat = jnp.concatenate([y_scr[:, r, :] for r in range(R)], axis=1)

    # ---- fcn head: Linear -> LReLU -> Linear -> LReLU -> Linear ----
    h = _lrelu(mm(flat, w5_ref) + prow(ROW_B5, 256))             # (B, 256)
    h = _lrelu(mm(h, w6_ref) + prow(ROW_B6, 32))                 # (B, 32)
    out = mm(h, w7_ref) + prow(ROW_B7, 2)                        # (B, 2)
    out_ref[...] = out.astype(out_ref.dtype)


def gnn_predictor_forward(m, node_feature, params, *, mm_dtype=jnp.float32):
    """Fused GNNPredictor forward.  `mm_dtype=jnp.bfloat16` feeds bf16 into the
    MXU on v6e/v7x (f32 accumulation, BN/elementwise stay f32)."""
    B, R, _ = m.shape
    Din = node_feature.shape[-1]
    # free, metadata-only reshapes so the kernel sees stacked 2-D operands
    m_st = m.reshape(B * R, R)
    nf_st = node_feature.reshape(B * R, Din)

    inputs = (m_st, nf_st,
              params["w0t"], params["w1t"], params["w2t"], params["w3t"],
              params["w4t"], params["w5t"], params["w6t"], params["w7t"],
              params["pvec"], params["gcol"])

    return pl.pallas_call(
        partial(fbnetgen_predictor_kernel, B, R, mm_dtype),
        out_shape=jax.ShapeDtypeStruct((B, 2), jnp.float32),
        in_specs=[pl.BlockSpec(memory_space=pltpu.MemorySpace.VMEM)
                  for _ in inputs],
        out_specs=pl.BlockSpec(memory_space=pltpu.MemorySpace.VMEM),
        scratch_shapes=[pltpu.VMEM((B, R, 8), jnp.float32)],
        compiler_params=pltpu.CompilerParams(vmem_limit_bytes=32 * 1024 * 1024),
    )(*inputs)


def init_params(key, node_input_dim, roi_num):
    """Deterministic PyTorch-style init (uniform +-1/sqrt(fan_in) for Linear,
    ones/zeros for BatchNorm affine params), packed for the fused kernel."""
    R = roi_num

    def linear(k, fan_in, fan_out):
        k1, k2 = jax.random.split(k)
        bound = 1.0 / (fan_in ** 0.5)
        w = jax.random.uniform(k1, (fan_out, fan_in), jnp.float32, -bound, bound)
        b = jax.random.uniform(k2, (fan_out,), jnp.float32, -bound, bound)
        return w, b

    ks = jax.random.split(key, 8)
    w0, b0 = linear(ks[0], node_input_dim, R)   # gcn[0]
    w1, b1 = linear(ks[1], R, R)                # gcn[2]
    w2, b2 = linear(ks[2], R, R)                # gcn1[0]
    w3, b3 = linear(ks[3], R, 64)               # gcn2[0]
    w4, b4 = linear(ks[4], 64, 8)               # gcn2[2]
    w5, b5 = linear(ks[5], 8 * R, 256)          # fcn[0]
    w6, b6 = linear(ks[6], 256, 32)             # fcn[2]
    w7, b7 = linear(ks[7], 32, 2)               # fcn[4]

    ones_r = jnp.ones((R,), jnp.float32)
    zeros_r = jnp.zeros((R,), jnp.float32)

    # pack the 12 small row-vector params into one (12, P) array (one DMA)
    P = max(R, 256)
    rows = [b0, b1, ones_r, zeros_r,            # ROW_B0, ROW_B1, ROW_G1, ROW_BE1
            b2, ones_r, zeros_r,                # ROW_B2, ROW_G2, ROW_BE2
            b3, b4, b5, b6, b7]                 # ROW_B3, ROW_B4, ROW_B5, ROW_B6, ROW_B7
    pvec = jnp.stack([jnp.pad(r, (0, P - r.shape[0])) for r in rows])

    # bn3 per-ROI affine params as one (R, 2) array: [:, 0]=gamma, [:, 1]=beta
    gcol = jnp.stack([ones_r, zeros_r], axis=1)

    return {
        "w0t": w0.T, "w1t": w1.T, "w2t": w2.T, "w3t": w3.T, "w4t": w4.T,
        "w5t": w5.T, "w6t": w6.T, "w7t": w7.T,
        "pvec": pvec, "gcol": gcol,
    }


if __name__ == "__main__":
    B, R, Din = 2, 8, 16  # small shapes: batch=2, roi_num=8, node_input_dim=16
    key = jax.random.PRNGKey(0)
    k_m, k_nf, k_p = jax.random.split(key, 3)

    m = jax.random.normal(k_m, (B, R, R), jnp.float32)
    node_feature = jax.random.normal(k_nf, (B, R, Din), jnp.float32)
    params = init_params(k_p, Din, R)

    out = gnn_predictor_forward(m, node_feature, params)
    out = jax.block_until_ready(out)
    assert out.shape == (B, 2) and out.dtype == jnp.float32
    print("KERNEL_OK")
</pallas_src>

<mosaic_0001>
module attributes {stable_mosaic.version = 11 : i64} {
  func.func @fbnetgen_predictor_kernel(%arg0: memref<16x8xf32, #tpu.memory_space<vmem>>, %arg1: memref<16x16xf32, #tpu.memory_space<vmem>>, %arg2: memref<16x8xf32, #tpu.memory_space<vmem>>, %arg3: memref<8x8xf32, #tpu.memory_space<vmem>>, %arg4: memref<8x8xf32, #tpu.memory_space<vmem>>, %arg5: memref<8x64xf32, #tpu.memory_space<vmem>>, %arg6: memref<64x8xf32, #tpu.memory_space<vmem>>, %arg7: memref<64x256xf32, #tpu.memory_space<vmem>>, %arg8: memref<256x32xf32, #tpu.memory_space<vmem>>, %arg9: memref<32x2xf32, #tpu.memory_space<vmem>>, %arg10: memref<12x256xf32, #tpu.memory_space<vmem>>, %arg11: memref<8x2xf32, #tpu.memory_space<vmem>>, %arg12: memref<2x2xf32, #tpu.memory_space<vmem>>, %arg13: memref<2x8x8xf32, #tpu.memory_space<vmem>>) attributes {dimension_semantics = [], scalar_prefetch = 0 : i64, scratch_operands = 1 : i64, tpu.core_type = #tpu.core_type<tc>} {
    %c0 = arith.constant 0 : index
    %c0_0 = arith.constant 0 : index
    %0 = vector.load %arg0[%c0, %c0_0] : memref<16x8xf32, #tpu.memory_space<vmem>>, vector<16x8xf32>
    %cst = arith.constant dense<0.000000e+00> : vector<16xf32>
    %1 = vector.multi_reduction <add>, %0, %cst [1] : vector<16x8xf32> to vector<16xf32>
    %2 = vector.shape_cast %1 : vector<16xf32> to vector<16x1xf32>
    %c0_1 = arith.constant 0 : index
    %c0_2 = arith.constant 0 : index
    %3 = vector.load %arg1[%c0_1, %c0_2] : memref<16x16xf32, #tpu.memory_space<vmem>>, vector<16x16xf32>
    %4 = vector.broadcast %2 : vector<16x1xf32> to vector<16x16xf32>
    %5 = arith.mulf %4, %3 : vector<16x16xf32>
    %c0_3 = arith.constant 0 : index
    %c0_4 = arith.constant 0 : index
    %6 = vector.load %arg2[%c0_3, %c0_4] : memref<16x8xf32, #tpu.memory_space<vmem>>, vector<16x8xf32>
    %cst_5 = arith.constant dense<0.000000e+00> : vector<16x8xf32>
    %7 = tpu.matmul %5, %6, %cst_5 {dimension_numbers = #tpu.dot_dimension_numbers<[1], [0], [0], [1], [0, 0, 1, 1], [], []>} : vector<16x16xf32>, vector<16x8xf32>, vector<16x8xf32> -> vector<16x8xf32>
    %c0_6 = arith.constant 0 : index
    %c0_7 = arith.constant 0 : index
    %8 = vector.load %arg10[%c0_6, %c0_7] : memref<12x256xf32, #tpu.memory_space<vmem>>, vector<1x8xf32>
    %9 = vector.broadcast %8 : vector<1x8xf32> to vector<16x8xf32>
    %10 = arith.addf %7, %9 : vector<16x8xf32>
    %cst_8 = arith.constant 0.000000e+00 : f32
    %11 = vector.broadcast %cst_8 : f32 to vector<16x8xf32>
    %12 = arith.cmpf oge, %10, %11 : vector<16x8xf32>
    %cst_9 = arith.constant 2.000000e-01 : f32
    %13 = vector.broadcast %cst_9 : f32 to vector<16x8xf32>
    %14 = arith.mulf %13, %10 : vector<16x8xf32>
    %15 = arith.select %12, %10, %14 : vector<16x8xi1>, vector<16x8xf32>
    %c0_10 = arith.constant 0 : index
    %c0_11 = arith.constant 0 : index
    %16 = vector.load %arg3[%c0_10, %c0_11] : memref<8x8xf32, #tpu.memory_space<vmem>>, vector<8x8xf32>
    %cst_12 = arith.constant dense<0.000000e+00> : vector<16x8xf32>
    %17 = tpu.matmul %15, %16, %cst_12 {dimension_numbers = #tpu.dot_dimension_numbers<[1], [0], [0], [1], [0, 0, 1, 1], [], []>} : vector<16x8xf32>, vector<8x8xf32>, vector<16x8xf32> -> vector<16x8xf32>
    %c1 = arith.constant 1 : index
    %c0_13 = arith.constant 0 : index
    %18 = vector.load %arg10[%c1, %c0_13] : memref<12x256xf32, #tpu.memory_space<vmem>>, vector<1x8xf32>
    %19 = vector.broadcast %18 : vector<1x8xf32> to vector<16x8xf32>
    %20 = arith.addf %17, %19 : vector<16x8xf32>
    %c2 = arith.constant 2 : index
    %c0_14 = arith.constant 0 : index
    %21 = vector.load %arg10[%c2, %c0_14] : memref<12x256xf32, #tpu.memory_space<vmem>>, vector<1x8xf32>
    %c3 = arith.constant 3 : index
    %c0_15 = arith.constant 0 : index
    %22 = vector.load %arg10[%c3, %c0_15] : memref<12x256xf32, #tpu.memory_space<vmem>>, vector<1x8xf32>
    %cst_16 = arith.constant dense<0.000000e+00> : vector<8xf32>
    %23 = vector.multi_reduction <add>, %20, %cst_16 [0] : vector<16x8xf32> to vector<8xf32>
    %24 = vector.shape_cast %23 : vector<8xf32> to vector<1x8xf32>
    %cst_17 = arith.constant 1.600000e+01 : f32
    %25 = vector.broadcast %cst_17 : f32 to vector<1x8xf32>
    %26 = arith.divf %24, %25 : vector<1x8xf32>
    %27 = vector.broadcast %26 : vector<1x8xf32> to vector<16x8xf32>
    %28 = arith.subf %20, %27 : vector<16x8xf32>
    %29 = arith.mulf %28, %28 : vector<16x8xf32>
    %cst_18 = arith.constant dense<0.000000e+00> : vector<8xf32>
    %30 = vector.multi_reduction <add>, %29, %cst_18 [0] : vector<16x8xf32> to vector<8xf32>
    %31 = vector.shape_cast %30 : vector<8xf32> to vector<1x8xf32>
    %cst_19 = arith.constant 1.600000e+01 : f32
    %32 = vector.broadcast %cst_19 : f32 to vector<1x8xf32>
    %33 = arith.divf %31, %32 : vector<1x8xf32>
    %cst_20 = arith.constant 9.99999974E-6 : f32
    %34 = vector.broadcast %cst_20 : f32 to vector<1x8xf32>
    %35 = arith.addf %33, %34 : vector<1x8xf32>
    %36 = math.rsqrt %35 : vector<1x8xf32>
    %37 = vector.broadcast %36 : vector<1x8xf32> to vector<16x8xf32>
    %38 = arith.mulf %28, %37 : vector<16x8xf32>
    %39 = vector.broadcast %21 : vector<1x8xf32> to vector<16x8xf32>
    %40 = arith.mulf %38, %39 : vector<16x8xf32>
    %41 = vector.broadcast %22 : vector<1x8xf32> to vector<16x8xf32>
    %42 = arith.addf %40, %41 : vector<16x8xf32>
    %43 = vector.broadcast %2 : vector<16x1xf32> to vector<16x8xf32>
    %44 = arith.mulf %43, %42 : vector<16x8xf32>
    %c0_21 = arith.constant 0 : index
    %c0_22 = arith.constant 0 : index
    %45 = vector.load %arg4[%c0_21, %c0_22] : memref<8x8xf32, #tpu.memory_space<vmem>>, vector<8x8xf32>
    %cst_23 = arith.constant dense<0.000000e+00> : vector<16x8xf32>
    %46 = tpu.matmul %44, %45, %cst_23 {dimension_numbers = #tpu.dot_dimension_numbers<[1], [0], [0], [1], [0, 0, 1, 1], [], []>} : vector<16x8xf32>, vector<8x8xf32>, vector<16x8xf32> -> vector<16x8xf32>
    %c4 = arith.constant 4 : index
    %c0_24 = arith.constant 0 : index
    %47 = vector.load %arg10[%c4, %c0_24] : memref<12x256xf32, #tpu.memory_space<vmem>>, vector<1x8xf32>
    %48 = vector.broadcast %47 : vector<1x8xf32> to vector<16x8xf32>
    %49 = arith.addf %46, %48 : vector<16x8xf32>
    %cst_25 = arith.constant 0.000000e+00 : f32
    %50 = vector.broadcast %cst_25 : f32 to vector<16x8xf32>
    %51 = arith.cmpf oge, %49, %50 : vector<16x8xf32>
    %cst_26 = arith.constant 2.000000e-01 : f32
    %52 = vector.broadcast %cst_26 : f32 to vector<16x8xf32>
    %53 = arith.mulf %52, %49 : vector<16x8xf32>
    %54 = arith.select %51, %49, %53 : vector<16x8xi1>, vector<16x8xf32>
    %c5 = arith.constant 5 : index
    %c0_27 = arith.constant 0 : index
    %55 = vector.load %arg10[%c5, %c0_27] : memref<12x256xf32, #tpu.memory_space<vmem>>, vector<1x8xf32>
    %c6 = arith.constant 6 : index
    %c0_28 = arith.constant 0 : index
    %56 = vector.load %arg10[%c6, %c0_28] : memref<12x256xf32, #tpu.memory_space<vmem>>, vector<1x8xf32>
    %cst_29 = arith.constant dense<0.000000e+00> : vector<8xf32>
    %57 = vector.multi_reduction <add>, %54, %cst_29 [0] : vector<16x8xf32> to vector<8xf32>
    %58 = vector.shape_cast %57 : vector<8xf32> to vector<1x8xf32>
    %cst_30 = arith.constant 1.600000e+01 : f32
    %59 = vector.broadcast %cst_30 : f32 to vector<1x8xf32>
    %60 = arith.divf %58, %59 : vector<1x8xf32>
    %61 = vector.broadcast %60 : vector<1x8xf32> to vector<16x8xf32>
    %62 = arith.subf %54, %61 : vector<16x8xf32>
    %63 = arith.mulf %62, %62 : vector<16x8xf32>
    %cst_31 = arith.constant dense<0.000000e+00> : vector<8xf32>
    %64 = vector.multi_reduction <add>, %63, %cst_31 [0] : vector<16x8xf32> to vector<8xf32>
    %65 = vector.shape_cast %64 : vector<8xf32> to vector<1x8xf32>
    %cst_32 = arith.constant 1.600000e+01 : f32
    %66 = vector.broadcast %cst_32 : f32 to vector<1x8xf32>
    %67 = arith.divf %65, %66 : vector<1x8xf32>
    %cst_33 = arith.constant 9.99999974E-6 : f32
    %68 = vector.broadcast %cst_33 : f32 to vector<1x8xf32>
    %69 = arith.addf %67, %68 : vector<1x8xf32>
    %70 = math.rsqrt %69 : vector<1x8xf32>
    %71 = vector.broadcast %70 : vector<1x8xf32> to vector<16x8xf32>
    %72 = arith.mulf %62, %71 : vector<16x8xf32>
    %73 = vector.broadcast %55 : vector<1x8xf32> to vector<16x8xf32>
    %74 = arith.mulf %72, %73 : vector<16x8xf32>
    %75 = vector.broadcast %56 : vector<1x8xf32> to vector<16x8xf32>
    %76 = arith.addf %74, %75 : vector<16x8xf32>
    %77 = vector.broadcast %2 : vector<16x1xf32> to vector<16x8xf32>
    %78 = arith.mulf %77, %76 : vector<16x8xf32>
    %c0_34 = arith.constant 0 : index
    %c0_35 = arith.constant 0 : index
    %79 = vector.load %arg5[%c0_34, %c0_35] : memref<8x64xf32, #tpu.memory_space<vmem>>, vector<8x64xf32>
    %cst_36 = arith.constant dense<0.000000e+00> : vector<16x64xf32>
    %80 = tpu.matmul %78, %79, %cst_36 {dimension_numbers = #tpu.dot_dimension_numbers<[1], [0], [0], [1], [0, 0, 1, 1], [], []>} : vector<16x8xf32>, vector<8x64xf32>, vector<16x64xf32> -> vector<16x64xf32>
    %c7 = arith.constant 7 : index
    %c0_37 = arith.constant 0 : index
    %81 = vector.load %arg10[%c7, %c0_37] : memref<12x256xf32, #tpu.memory_space<vmem>>, vector<1x64xf32>
    %82 = vector.broadcast %81 : vector<1x64xf32> to vector<16x64xf32>
    %83 = arith.addf %80, %82 : vector<16x64xf32>
    %cst_38 = arith.constant 0.000000e+00 : f32
    %84 = vector.broadcast %cst_38 : f32 to vector<16x64xf32>
    %85 = arith.cmpf oge, %83, %84 : vector<16x64xf32>
    %cst_39 = arith.constant 2.000000e-01 : f32
    %86 = vector.broadcast %cst_39 : f32 to vector<16x64xf32>
    %87 = arith.mulf %86, %83 : vector<16x64xf32>
    %88 = arith.select %85, %83, %87 : vector<16x64xi1>, vector<16x64xf32>
    %c0_40 = arith.constant 0 : index
    %c0_41 = arith.constant 0 : index
    %89 = vector.load %arg6[%c0_40, %c0_41] : memref<64x8xf32, #tpu.memory_space<vmem>>, vector<64x8xf32>
    %cst_42 = arith.constant dense<0.000000e+00> : vector<16x8xf32>
    %90 = tpu.matmul %88, %89, %cst_42 {dimension_numbers = #tpu.dot_dimension_numbers<[1], [0], [0], [1], [0, 0, 1, 1], [], []>} : vector<16x64xf32>, vector<64x8xf32>, vector<16x8xf32> -> vector<16x8xf32>
    %c8 = arith.constant 8 : index
    %c0_43 = arith.constant 0 : index
    %91 = vector.load %arg10[%c8, %c0_43] : memref<12x256xf32, #tpu.memory_space<vmem>>, vector<1x8xf32>
    %92 = vector.broadcast %91 : vector<1x8xf32> to vector<16x8xf32>
    %93 = arith.addf %90, %92 : vector<16x8xf32>
    %cst_44 = arith.constant 0.000000e+00 : f32
    %94 = vector.broadcast %cst_44 : f32 to vector<16x8xf32>
    %95 = arith.cmpf oge, %93, %94 : vector<16x8xf32>
    %cst_45 = arith.constant 2.000000e-01 : f32
    %96 = vector.broadcast %cst_45 : f32 to vector<16x8xf32>
    %97 = arith.mulf %96, %93 : vector<16x8xf32>
    %98 = arith.select %95, %93, %97 : vector<16x8xi1>, vector<16x8xf32>
    %99 = vector.shape_cast %98 : vector<16x8xf32> to vector<2x8x8xf32>
    %cst_46 = arith.constant dense<0.000000e+00> : vector<2x8xf32>
    %100 = vector.multi_reduction <add>, %99, %cst_46 [2] : vector<2x8x8xf32> to vector<2x8xf32>
    %101 = vector.shape_cast %100 : vector<2x8xf32> to vector<2x8x1xf32>
    %cst_47 = arith.constant dense<0.000000e+00> : vector<8x1xf32>
    %102 = vector.multi_reduction <add>, %101, %cst_47 [0] : vector<2x8x1xf32> to vector<8x1xf32>
    %103 = vector.shape_cast %102 : vector<8x1xf32> to vector<1x8x1xf32>
    %cst_48 = arith.constant 1.600000e+01 : f32
    %104 = vector.broadcast %cst_48 : f32 to vector<1x8x1xf32>
    %105 = arith.divf %103, %104 : vector<1x8x1xf32>
    %106 = vector.broadcast %105 : vector<1x8x1xf32> to vector<2x8x8xf32>
    %107 = arith.subf %99, %106 : vector<2x8x8xf32>
    %108 = arith.mulf %107, %107 : vector<2x8x8xf32>
    %cst_49 = arith.constant dense<0.000000e+00> : vector<2x8xf32>
    %109 = vector.multi_reduction <add>, %108, %cst_49 [2] : vector<2x8x8xf32> to vector<2x8xf32>
    %110 = vector.shape_cast %109 : vector<2x8xf32> to vector<2x8x1xf32>
    %cst_50 = arith.constant dense<0.000000e+00> : vector<8x1xf32>
    %111 = vector.multi_reduction <add>, %110, %cst_50 [0] : vector<2x8x1xf32> to vector<8x1xf32>
    %112 = vector.shape_cast %111 : vector<8x1xf32> to vector<1x8x1xf32>
    %cst_51 = arith.constant 1.600000e+01 : f32
    %113 = vector.broadcast %cst_51 : f32 to vector<1x8x1xf32>
    %114 = arith.divf %112, %113 : vector<1x8x1xf32>
    %cst_52 = arith.constant 9.99999974E-6 : f32
    %115 = vector.broadcast %cst_52 : f32 to vector<1x8x1xf32>
    %116 = arith.addf %114, %115 : vector<1x8x1xf32>
    %117 = math.rsqrt %116 : vector<1x8x1xf32>
    %c0_53 = arith.constant 0 : index
    %c0_54 = arith.constant 0 : index
    %118 = vector.load %arg11[%c0_53, %c0_54] : memref<8x2xf32, #tpu.memory_space<vmem>>, vector<8x1xf32>
    %c0_55 = arith.constant 0 : index
    %c1_56 = arith.constant 1 : index
    %119 = vector.load %arg11[%c0_55, %c1_56] : memref<8x2xf32, #tpu.memory_space<vmem>>, vector<8x1xf32>
    %120 = vector.broadcast %117 : vector<1x8x1xf32> to vector<2x8x8xf32>
    %121 = arith.mulf %107, %120 : vector<2x8x8xf32>
    %122 = vector.shape_cast %118 : vector<8x1xf32> to vector<1x8x1xf32>
    %123 = vector.broadcast %122 : vector<1x8x1xf32> to vector<2x8x8xf32>
    %124 = arith.mulf %121, %123 : vector<2x8x8xf32>
    %125 = vector.shape_cast %119 : vector<8x1xf32> to vector<1x8x1xf32>
    %126 = vector.broadcast %125 : vector<1x8x1xf32> to vector<2x8x8xf32>
    %127 = arith.addf %124, %126 : vector<2x8x8xf32>
    %c0_57 = arith.constant 0 : index
    %c0_58 = arith.constant 0 : index
    %c0_59 = arith.constant 0 : index
    %128 = vector.load %arg13[%c0_57, %c0_58, %c0_59] : memref<2x8x8xf32, #tpu.memory_space<vmem>>, vector<2x8x8xf32>
    tpu.vector_store %arg13[%c0_57, %c0_58, %c0_59], %127 {strides = array<i32>} : memref<2x8x8xf32, #tpu.memory_space<vmem>>, vector<2x8x8xf32>,
    %c0_60 = arith.constant 0 : index
    %c0_61 = arith.constant 0 : index
    %c0_62 = arith.constant 0 : index
    %129 = vector.load %arg13[%c0_60, %c0_61, %c0_62] : memref<2x8x8xf32, #tpu.memory_space<vmem>>, vector<2x1x8xf32>
    %130 = vector.shape_cast %129 : vector<2x1x8xf32> to vector<2x8xf32>
    %c0_63 = arith.constant 0 : index
    %c1_64 = arith.constant 1 : index
    %c0_65 = arith.constant 0 : index
    %131 = vector.load %arg13[%c0_63, %c1_64, %c0_65] : memref<2x8x8xf32, #tpu.memory_space<vmem>>, vector<2x1x8xf32>
    %132 = vector.shape_cast %131 : vector<2x1x8xf32> to vector<2x8xf32>
    %c0_66 = arith.constant 0 : index
    %c2_67 = arith.constant 2 : index
    %c0_68 = arith.constant 0 : index
    %133 = vector.load %arg13[%c0_66, %c2_67, %c0_68] : memref<2x8x8xf32, #tpu.memory_space<vmem>>, vector<2x1x8xf32>
    %134 = vector.shape_cast %133 : vector<2x1x8xf32> to vector<2x8xf32>
    %c0_69 = arith.constant 0 : index
    %c3_70 = arith.constant 3 : index
    %c0_71 = arith.constant 0 : index
    %135 = vector.load %arg13[%c0_69, %c3_70, %c0_71] : memref<2x8x8xf32, #tpu.memory_space<vmem>>, vector<2x1x8xf32>
    %136 = vector.shape_cast %135 : vector<2x1x8xf32> to vector<2x8xf32>
    %c0_72 = arith.constant 0 : index
    %c4_73 = arith.constant 4 : index
    %c0_74 = arith.constant 0 : index
    %137 = vector.load %arg13[%c0_72, %c4_73, %c0_74] : memref<2x8x8xf32, #tpu.memory_space<vmem>>, vector<2x1x8xf32>
    %138 = vector.shape_cast %137 : vector<2x1x8xf32> to vector<2x8xf32>
    %c0_75 = arith.constant 0 : index
    %c5_76 = arith.constant 5 : index
    %c0_77 = arith.constant 0 : index
    %139 = vector.load %arg13[%c0_75, %c5_76, %c0_77] : memref<2x8x8xf32, #tpu.memory_space<vmem>>, vector<2x1x8xf32>
    %140 = vector.shape_cast %139 : vector<2x1x8xf32> to vector<2x8xf32>
    %c0_78 = arith.constant 0 : index
    %c6_79 = arith.constant 6 : index
    %c0_80 = arith.constant 0 : index
    %141 = vector.load %arg13[%c0_78, %c6_79, %c0_80] : memref<2x8x8xf32, #tpu.memory_space<vmem>>, vector<2x1x8xf32>
    %142 = vector.shape_cast %141 : vector<2x1x8xf32> to vector<2x8xf32>
    %c0_81 = arith.constant 0 : index
    %c7_82 = arith.constant 7 : index
    %c0_83 = arith.constant 0 : index
    %143 = vector.load %arg13[%c0_81, %c7_82, %c0_83] : memref<2x8x8xf32, #tpu.memory_space<vmem>>, vector<2x1x8xf32>
    %144 = vector.shape_cast %143 : vector<2x1x8xf32> to vector<2x8xf32>
    %145 = tpu.concatenate %130, %132, %134, %136, %138, %140, %142, %144 in 1 : vector<2x8xf32>, vector<2x8xf32>, vector<2x8xf32>, vector<2x8xf32>, vector<2x8xf32>, vector<2x8xf32>, vector<2x8xf32>, vector<2x8xf32> -> vector<2x64xf32>
    %c0_84 = arith.constant 0 : index
    %c0_85 = arith.constant 0 : index
    %146 = vector.load %arg7[%c0_84, %c0_85] : memref<64x256xf32, #tpu.memory_space<vmem>>, vector<64x256xf32>
    %cst_86 = arith.constant dense<0.000000e+00> : vector<2x256xf32>
    %147 = tpu.matmul %145, %146, %cst_86 {dimension_numbers = #tpu.dot_dimension_numbers<[1], [0], [0], [1], [0, 0, 1, 1], [], []>} : vector<2x64xf32>, vector<64x256xf32>, vector<2x256xf32> -> vector<2x256xf32>
    %c9 = arith.constant 9 : index
    %c0_87 = arith.constant 0 : index
    %148 = vector.load %arg10[%c9, %c0_87] : memref<12x256xf32, #tpu.memory_space<vmem>>, vector<1x256xf32>
    %149 = vector.broadcast %148 : vector<1x256xf32> to vector<2x256xf32>
    %150 = arith.addf %147, %149 : vector<2x256xf32>
    %cst_88 = arith.constant 0.000000e+00 : f32
    %151 = vector.broadcast %cst_88 : f32 to vector<2x256xf32>
    %152 = arith.cmpf oge, %150, %151 : vector<2x256xf32>
    %cst_89 = arith.constant 2.000000e-01 : f32
    %153 = vector.broadcast %cst_89 : f32 to vector<2x256xf32>
    %154 = arith.mulf %153, %150 : vector<2x256xf32>
    %155 = arith.select %152, %150, %154 : vector<2x256xi1>, vector<2x256xf32>
    %c0_90 = arith.constant 0 : index
    %c0_91 = arith.constant 0 : index
    %156 = vector.load %arg8[%c0_90, %c0_91] : memref<256x32xf32, #tpu.memory_space<vmem>>, vector<256x32xf32>
    %cst_92 = arith.constant dense<0.000000e+00> : vector<2x32xf32>
    %157 = tpu.matmul %155, %156, %cst_92 {dimension_numbers = #tpu.dot_dimension_numbers<[1], [0], [0], [1], [0, 0, 1, 1], [], []>} : vector<2x256xf32>, vector<256x32xf32>, vector<2x32xf32> -> vector<2x32xf32>
    %c10 = arith.constant 10 : index
    %c0_93 = arith.constant 0 : index
    %158 = vector.load %arg10[%c10, %c0_93] : memref<12x256xf32, #tpu.memory_space<vmem>>, vector<1x32xf32>
    %159 = vector.broadcast %158 : vector<1x32xf32> to vector<2x32xf32>
    %160 = arith.addf %157, %159 : vector<2x32xf32>
    %cst_94 = arith.constant 0.000000e+00 : f32
    %161 = vector.broadcast %cst_94 : f32 to vector<2x32xf32>
    %162 = arith.cmpf oge, %160, %161 : vector<2x32xf32>
    %cst_95 = arith.constant 2.000000e-01 : f32
    %163 = vector.broadcast %cst_95 : f32 to vector<2x32xf32>
    %164 = arith.mulf %163, %160 : vector<2x32xf32>
    %165 = arith.select %162, %160, %164 : vector<2x32xi1>, vector<2x32xf32>
    %c0_96 = arith.constant 0 : index
    %c0_97 = arith.constant 0 : index
    %166 = vector.load %arg9[%c0_96, %c0_97] : memref<32x2xf32, #tpu.memory_space<vmem>>, vector<32x2xf32>
    %cst_98 = arith.constant dense<0.000000e+00> : vector<2x2xf32>
    %167 = tpu.matmul %165, %166, %cst_98 {dimension_numbers = #tpu.dot_dimension_numbers<[1], [0], [0], [1], [0, 0, 1, 1], [], []>} : vector<2x32xf32>, vector<32x2xf32>, vector<2x2xf32> -> vector<2x2xf32>
    %c11 = arith.constant 11 : index
    %c0_99 = arith.constant 0 : index
    %168 = vector.load %arg10[%c11, %c0_99] : memref<12x256xf32, #tpu.memory_space<vmem>>, vector<1x2xf32>
    %169 = vector.broadcast %168 : vector<1x2xf32> to vector<2x2xf32>
    %170 = arith.addf %167, %169 : vector<2x2xf32>
    %c0_100 = arith.constant 0 : index
    %c0_101 = arith.constant 0 : index
    %171 = vector.load %arg12[%c0_100, %c0_101] : memref<2x2xf32, #tpu.memory_space<vmem>>, vector<2x2xf32>
    tpu.vector_store %arg12[%c0_100, %c0_101], %170 {strides = array<i32>} : memref<2x2xf32, #tpu.memory_space<vmem>>, vector<2x2xf32>,
    return
  }
}

</mosaic_0001>

<llo_original>
// kernel: tpu_custom_call.1
$region0: #{tpu_custom_call.1}
  #allocation0 [shape = 'u32[]', space=smem, size = 0x4, offset = 0x4, fixed_abs, tag = 'smem constant byte address 0x4 - core index']
  #allocation1 [shape = 'u32[144,128]{1,0:T(1,128)}', space=vmem, size = 0x12000, scoped, tag = 'internal scratch']
  #allocation2 [shape = 'f32[2,8,8]{2,1,0:T(8,128)}', space=vmem, size = 0x2000, scoped, tag = 'scratch operand']
  %s0 = inlined_call_operand.vmem [shape: f32[16,8], index: 0, kind: input, shape index: {}]
  %s1 = inlined_call_operand.vmem [shape: f32[16,16], index: 1, kind: input, shape index: {}]
  %s2 = inlined_call_operand.vmem [shape: f32[16,8], index: 2, kind: input, shape index: {}]
  %s3 = inlined_call_operand.vmem [shape: f32[8,8], index: 3, kind: input, shape index: {}]
  %s4 = inlined_call_operand.vmem [shape: f32[8,8], index: 4, kind: input, shape index: {}]
  %s5 = inlined_call_operand.vmem [shape: f32[8,64], index: 5, kind: input, shape index: {}]
  %s6 = inlined_call_operand.vmem [shape: f32[64,8], index: 6, kind: input, shape index: {}]
  %s7 = inlined_call_operand.vmem [shape: f32[64,256], index: 7, kind: input, shape index: {}]
  %s8 = inlined_call_operand.vmem [shape: f32[256,32], index: 8, kind: input, shape index: {}]
  %s9 = inlined_call_operand.vmem [shape: f32[32,2], index: 9, kind: input, shape index: {}]
  %s10 = inlined_call_operand.vmem [shape: f32[12,256], index: 10, kind: input, shape index: {}]
  %s11 = inlined_call_operand.vmem [shape: f32[8,2], index: 11, kind: input, shape index: {}]
  %s12 = inlined_call_operand.hbm [shape: f32[2,2], index: 12, kind: output, shape index: {}]
  %s13 = sld [smem:[#allocation0]]
  $region58: #{tpu_custom_call.1} parent=0
    _
  %s15 = ssub.s32 1, %s13
  %s16 = scalar_select 0, %s15, %s13
  $region1: #{tpu_custom_call.1} parent=0
    #allocation3 [shape = 'u8[1024]{0}', space=vmem, size = 0x400, scoped, tag = 'output window, operand 0, single buffered']
    #allocation4 [shape = 's32[1]{0}', space=sflag, size = 0x4, scoped, tag = 'scoped memory for tpu_custom_call.1']
    %17 = vsyncpa [#allocation4], 0
    // Predicated region
    $region2: #{tpu_custom_call.1} parent=1 // pred_check
      _
    $region3: #{tpu_custom_call.1} parent=1 // pred_check_branch
      %19 = sbr.rel (0) target = $region5
    $region4: #{tpu_custom_call.1} parent=1 // pred_region
      _
    $region5: #{tpu_custom_call.1} parent=1 // pred_fallthru
      _
    // Predicated region
    $region6: #{tpu_custom_call.1} parent=1 // pred_check
      _
    $region7: #{tpu_custom_call.1} parent=1 // pred_check_branch
      %21 = sbr.rel (0) target = $region9
    $region8: #{tpu_custom_call.1} parent=1 // pred_region
      _
    $region9: #{tpu_custom_call.1} parent=1 // pred_fallthru
      _
    // Predicated region
    $region10: #{tpu_custom_call.1} parent=1 // pred_check
      _
    $region11: #{tpu_custom_call.1} parent=1 // pred_check_branch
      %23 = sbr.rel (0) target = $region13
    $region12: #{tpu_custom_call.1} parent=1 // pred_region
      _
    $region13: #{tpu_custom_call.1} parent=1 // pred_fallthru
      _
    // Predicated region
    $region14: #{tpu_custom_call.1} parent=1 // pred_check
      _
    $region15: #{tpu_custom_call.1} parent=1 // pred_check_branch
      %25 = sbr.rel (0) target = $region17
    $region16: #{tpu_custom_call.1} parent=1 // pred_region
      _
    $region17: #{tpu_custom_call.1} parent=1 // pred_fallthru
      _
    // Predicated region
    $region18: #{tpu_custom_call.1} parent=1 // pred_check
      _
    $region19: #{tpu_custom_call.1} parent=1 // pred_check_branch
      %27 = sbr.rel (0) target = $region21
    $region20: #{tpu_custom_call.1} parent=1 // pred_region
      _
    $region21: #{tpu_custom_call.1} parent=1 // pred_fallthru
      _
    // Predicated region
    $region22: #{tpu_custom_call.1} parent=1 // pred_check
      _
    $region23: #{tpu_custom_call.1} parent=1 // pred_check_branch
      %29 = sbr.rel (0) target = $region25
    $region24: #{tpu_custom_call.1} parent=1 // pred_region
      _
    $region25: #{tpu_custom_call.1} parent=1 // pred_fallthru
      _
    // Predicated region
    $region26: #{tpu_custom_call.1} parent=1 // pred_check
      _
    $region27: #{tpu_custom_call.1} parent=1 // pred_check_branch
      %31 = sbr.rel (0) target = $region29
    $region28: #{tpu_custom_call.1} parent=1 // pred_region
      _
    $region29: #{tpu_custom_call.1} parent=1 // pred_fallthru
      _
    // Predicated region
    $region30: #{tpu_custom_call.1} parent=1 // pred_check
      _
    $region31: #{tpu_custom_call.1} parent=1 // pred_check_branch
      %33 = sbr.rel (0) target = $region33
    $region32: #{tpu_custom_call.1} parent=1 // pred_region
      _
    $region33: #{tpu_custom_call.1} parent=1 // pred_fallthru
      _
    // Predicated region
    $region34: #{tpu_custom_call.1} parent=1 // pred_check
      _
    $region35: #{tpu_custom_call.1} parent=1 // pred_check_branch
      %35 = sbr.rel (0) target = $region37
    $region36: #{tpu_custom_call.1} parent=1 // pred_region
      _
    $region37: #{tpu_custom_call.1} parent=1 // pred_fallthru
      _
    // Predicated region
    $region38: #{tpu_custom_call.1} parent=1 // pred_check
      _
    $region39: #{tpu_custom_call.1} parent=1 // pred_check_branch
      %37 = sbr.rel (0) target = $region41
    $region40: #{tpu_custom_call.1} parent=1 // pred_region
      _
    $region41: #{tpu_custom_call.1} parent=1 // pred_fallthru
      _
    // Predicated region
    $region42: #{tpu_custom_call.1} parent=1 // pred_check
      _
    $region43: #{tpu_custom_call.1} parent=1 // pred_check_branch
      %39 = sbr.rel (0) target = $region45
    $region44: #{tpu_custom_call.1} parent=1 // pred_region
      _
    $region45: #{tpu_custom_call.1} parent=1 // pred_fallthru
      _
    // Predicated region
    $region46: #{tpu_custom_call.1} parent=1 // pred_check
      _
    $region47: #{tpu_custom_call.1} parent=1 // pred_check_branch
      %41 = sbr.rel (0) target = $region49
    $region48: #{tpu_custom_call.1} parent=1 // pred_region
      _
    $region49: #{tpu_custom_call.1} parent=1 // pred_fallthru
      _
    %v42 = vld [vmem:[%s0] sm:$0xff]
    %v43 = vld [vmem:[%s0 + $0x8] sm:$0xff]
    %vm44 = vcmask 64512
    %v45 = vsel %vm44, %v42, 0.0
    %46 = vadd.xlane.f32.xlu0 %v45
    %v47 = vpop.xlane.xlu0 %46
    %v48 = vsel %vm44, %v43, 0.0
    %49 = vadd.xlane.f32.xlu0 %v48
    %v50 = vpop.xlane.xlu0 %49
    %v51 = vld [vmem:[%s1] sm:$0xff]
    %v52 = vld [vmem:[%s1 + $0x8] sm:$0xff]
    %v53 = vmul.f32 %v47, %v51
    %v54 = vmul.f32 %v50, %v52
    %v55 = vld [vmem:[%s2] sm:$0xff]
    %v56 = vld [vmem:[%s2 + $0x8] sm:$0xff]
    %v57 = vld [vmem:[%s10] ss:$0 sm:$0xff]
    %vm58 = vcmask 130048
    %v60 = vsel %vm58, %v53, 0
    %v63 = vsel %vm58, %v54, 0
    %65 = vmatprep.subr.mxu0 0.0
    %66 = vmatpush1.msra.mxu0 %v55
    %67 = vmatprep.subr.mxu0 0.0
    %68 = vmatpush1.msra.mxu0 %v56
    %69 = vmatprep.subr.mxu0 0.0
    %70 = vmatpush1.msra.mxu0 0.0
    %71 = vmatprep.subr.mxu0 0.0
    %72 = vmatpush1.msra.mxu0 0.0
    %73 = vmatprep.subr.mxu0 0.0
    %74 = vmatpush1.msra.mxu0 0.0
    %75 = vmatprep.subr.mxu0 0.0
    %76 = vmatpush1.msra.mxu0 0.0
    %77 = vmatprep.subr.mxu0 0.0
    %78 = vmatpush1.msra.mxu0 0.0
    %79 = vmatprep.subr.mxu0 0.0
    %80 = vmatpush1.msra.mxu0 0.0
    %81 = vmatprep.subr.mxu0 0.0
    %82 = vmatpush1.msra.mxu0 0.0
    %83 = vmatprep.subr.mxu0 0.0
    %84 = vmatpush1.msra.mxu0 0.0
    %85 = vmatprep.subr.mxu0 0.0
    %86 = vmatpush1.msra.mxu0 0.0
    %87 = vmatprep.subr.mxu0 0.0
    %88 = vmatpush1.msra.mxu0 0.0
    %89 = vmatprep.subr.mxu0 0.0
    %90 = vmatpush1.msra.mxu0 0.0
    %91 = vmatprep.subr.mxu0 0.0
    %92 = vmatpush1.msra.mxu0 0.0
    %93 = vmatprep.subr.mxu0 0.0
    %94 = vmatpush1.msra.mxu0 0.0
    %95 = vmatprep.subr.mxu0 0.0
    %96 = vmatpush1.msra.mxu0 0.0
    %97 = vmatprep.subr.mxu0 0.0
    %98 = vmatpush1.msra.mxu0 0.0
    %99 = vmatprep.subr.mxu0 0.0
    %100 = vmatpush1.msra.mxu0 0.0
    %101 = vmatprep.subr.mxu0 0.0
    %102 = vmatpush1.msra.mxu0 0.0
    %103 = vmatprep.subr.mxu0 0.0
    %104 = vmatpush1.msra.mxu0 0.0
    %105 = vmatprep.subr.mxu0 0.0
    %106 = vmatpush1.msra.mxu0 0.0
    %107 = vmatprep.subr.mxu0 0.0
    %108 = vmatpush1.msra.mxu0 0.0
    %109 = vmatprep.subr.mxu0 0.0
    %110 = vmatpush1.msra.mxu0 0.0
    %111 = vmatprep.subr.mxu0 0.0
    %112 = vmatpush1.msra.mxu0 0.0
    %113 = vmatprep.subr.mxu0 0.0
    %114 = vmatpush1.msra.mxu0 0.0
    %115 = vmatprep.subr.mxu0 0.0
    %116 = vmatpush1.msra.mxu0 0.0
    %117 = vmatprep.subr.mxu0 0.0
    %118 = vmatpush1.msra.mxu0 0.0
    %119 = vmatprep.subr.mxu0 0.0
    %120 = vmatpush1.msra.mxu0 0.0
    %121 = vmatprep.subr.mxu0 0.0
    %122 = vmatpush1.msra.mxu0 0.0
    %123 = vmatprep.subr.mxu0 0.0
    %124 = vmatpush1.msra.mxu0 0.0
    %125 = vmatprep.subr.mxu0 0.0
    %126 = vmatpush1.msra.mxu0 0.0
    %127 = vmatprep.subr.mxu0 0.0
    %128 = vmatpush1.msra.mxu0 0.0
    %129 = vmatprep.mubr.f32.mxu0 0.0
    %130 = vmatmul.mubr.f32.gmra.mrb[0].mxu0 %v60
    %v131 = vpop.f32.mrb[0].mxu0
    %v132 = vadd.f32 %v57, %v131
    %v133 = vpop.f32.mrb[0].mxu0
    %134 = vmatprep.mubr.f32.mxu0 0.0
    %135 = vmatmul.mubr.f32.gmra.mrb[0].mxu0 %v63
    %v136 = vpop.f32.mrb[0].mxu0
    %v137 = vadd.f32 %v57, %v136
    %v138 = vpop.f32.mrb[0].mxu0
    %139 = vdwg.mxu0
    %vm140 = vcmp.ge.f32.partialorder %v132, 0.0
    %vm141 = vcmp.ge.f32.partialorder %v137, 0.0
    %v142 = vmul.f32 %v132, 0.2
    %v143 = vmul.f32 %v137, 0.2
    %v144 = vsel %vm140, %v132, %v142
    %v145 = vsel %vm141, %v137, %v143
    %v146 = vld [vmem:[%s3] sm:$0xff]
    %v147 = vld [vmem:[%s10 + $0x1] ss:$0 sm:$0xff]
    %v149 = vsel %vm44, %v144, 0
    %v152 = vsel %vm44, %v145, 0
    %154 = vmatprep.subr.mxu0 0.0
    %155 = vmatpush1.msra.mxu0 %v146
    %156 = vmatprep.subr.mxu0 0.0
    %157 = vmatpush1.msra.mxu0 0.0
    %158 = vmatprep.subr.mxu0 0.0
    %159 = vmatpush1.msra.mxu0 0.0
    %160 = vmatprep.subr.mxu0 0.0
    %161 = vmatpush1.msra.mxu0 0.0
    %162 = vmatprep.subr.mxu0 0.0
    %163 = vmatpush1.msra.mxu0 0.0
    %164 = vmatprep.subr.mxu0 0.0
    %165 = vmatpush1.msra.mxu0 0.0
    %166 = vmatprep.subr.mxu0 0.0
    %167 = vmatpush1.msra.mxu0 0.0
    %168 = vmatprep.subr.mxu0 0.0
    %169 = vmatpush1.msra.mxu0 0.0
    %170 = vmatprep.subr.mxu0 0.0
    %171 = vmatpush1.msra.mxu0 0.0
    %172 = vmatprep.subr.mxu0 0.0
    %173 = vmatpush1.msra.mxu0 0.0
    %174 = vmatprep.subr.mxu0 0.0
    %175 = vmatpush1.msra.mxu0 0.0
    %176 = vmatprep.subr.mxu0 0.0
    %177 = vmatpush1.msra.mxu0 0.0
    %178 = vmatprep.subr.mxu0 0.0
    %179 = vmatpush1.msra.mxu0 0.0
    %180 = vmatprep.subr.mxu0 0.0
    %181 = vmatpush1.msra.mxu0 0.0
    %182 = vmatprep.subr.mxu0 0.0
    %183 = vmatpush1.msra.mxu0 0.0
    %184 = vmatprep.subr.mxu0 0.0
    %185 = vmatpush1.msra.mxu0 0.0
    %186 = vmatprep.subr.mxu0 0.0
    %187 = vmatpush1.msra.mxu0 0.0
    %188 = vmatprep.subr.mxu0 0.0
    %189 = vmatpush1.msra.mxu0 0.0
    %190 = vmatprep.subr.mxu0 0.0
    %191 = vmatpush1.msra.mxu0 0.0
    %192 = vmatprep.subr.mxu0 0.0
    %193 = vmatpush1.msra.mxu0 0.0
    %194 = vmatprep.subr.mxu0 0.0
    %195 = vmatpush1.msra.mxu0 0.0
    %196 = vmatprep.subr.mxu0 0.0
    %197 = vmatpush1.msra.mxu0 0.0
    %198 = vmatprep.subr.mxu0 0.0
    %199 = vmatpush1.msra.mxu0 0.0
    %200 = vmatprep.subr.mxu0 0.0
    %201 = vmatpush1.msra.mxu0 0.0
    %202 = vmatprep.subr.mxu0 0.0
    %203 = vmatpush1.msra.mxu0 0.0
    %204 = vmatprep.subr.mxu0 0.0
    %205 = vmatpush1.msra.mxu0 0.0
    %206 = vmatprep.subr.mxu0 0.0
    %207 = vmatpush1.msra.mxu0 0.0
    %208 = vmatprep.subr.mxu0 0.0
    %209 = vmatpush1.msra.mxu0 0.0
    %210 = vmatprep.subr.mxu0 0.0
    %211 = vmatpush1.msra.mxu0 0.0
    %212 = vmatprep.subr.mxu0 0.0
    %213 = vmatpush1.msra.mxu0 0.0
    %214 = vmatprep.subr.mxu0 0.0
    %215 = vmatpush1.msra.mxu0 0.0
    %216 = vmatprep.subr.mxu0 0.0
    %217 = vmatpush1.msra.mxu0 0.0
    %218 = vmatprep.mubr.f32.mxu0 0.0
    %219 = vmatmul.mubr.f32.gmra.mrb[0].mxu0 %v149
    %v220 = vpop.f32.mrb[0].mxu0
    %v221 = vadd.f32 %v147, %v220
    %v222 = vpop.f32.mrb[0].mxu0
    %223 = vmatprep.mubr.f32.mxu0 0.0
    %224 = vmatmul.mubr.f32.gmra.mrb[0].mxu0 %v152
    %v225 = vpop.f32.mrb[0].mxu0
    %v226 = vadd.f32 %v147, %v225
    %v227 = vpop.f32.mrb[0].mxu0
    %228 = vdwg.mxu0
    %v229 = vld [vmem:[%s10 + $0x2] ss:$0 sm:$0xff]
    %v230 = vld [vmem:[%s10 + $0x3] ss:$0 sm:$0xff]
    %v231 = vsel %vm44, %v221, 0.0
    %v232 = vsel %vm44, %v226, 0.0
    %v233 = vadd.f32 %v231, %v232
    %v234 = vrot.slane %v233, 4
    %v235 = vadd.f32 %v233, %v234
    %v236 = vrot.slane %v235, 2
    %v237 = vadd.f32 %v235, %v236
    %v238 = vrot.slane %v237, 1
    %v239 = vadd.f32 %v237, %v238
    %v240 = vrcp.pop 16.0
    %v241 = vmul.f32 %v239, %v240
    %v242 = vsub.f32 %v221, %v241
    %v243 = vsub.f32 %v226, %v241
    %v244 = vmul.f32 %v242, %v242
    %v245 = vmul.f32 %v243, %v243
    %v246 = vsel %vm44, %v244, 0.0
    %v247 = vsel %vm44, %v245, 0.0
    %v248 = vadd.f32 %v246, %v247
    %v249 = vrot.slane %v248, 4
    %v250 = vadd.f32 %v248, %v249
    %v251 = vrot.slane %v250, 2
    %v252 = vadd.f32 %v250, %v251
    %v253 = vrot.slane %v252, 1
    %v254 = vadd.f32 %v252, %v253
    %v255 = vmul.f32 %v254, %v240
    %v256 = vadd.f32 %v255, 1e-05
    %v257 = vrsqrt.pop %v256
    %v258 = vmul.f32 %v242, %v257
    %v259 = vmul.f32 %v243, %v257
    %v260 = vmul.f32 %v258, %v229
    %v261 = vmul.f32 %v259, %v229
    %v262 = vadd.f32 %v260, %v230
    %v263 = vadd.f32 %v261, %v230
    %v264 = vmul.f32 %v47, %v262
    %v265 = vmul.f32 %v50, %v263
    %v266 = vld [vmem:[%s4] sm:$0xff]
    %v267 = vld [vmem:[%s10 + $0x4] ss:$0 sm:$0xff]
    %v269 = vsel %vm44, %v264, 0
    %v272 = vsel %vm44, %v265, 0
    %274 = vmatprep.subr.mxu0 0.0
    %275 = vmatpush1.msra.mxu0 %v266
    %276 = vmatprep.subr.mxu0 0.0
    %277 = vmatpush1.msra.mxu0 0.0
    %278 = vmatprep.subr.mxu0 0.0
    %279 = vmatpush1.msra.mxu0 0.0
    %280 = vmatprep.subr.mxu0 0.0
    %281 = vmatpush1.msra.mxu0 0.0
    %282 = vmatprep.subr.mxu0 0.0
    %283 = vmatpush1.msra.mxu0 0.0
    %284 = vmatprep.subr.mxu0 0.0
    %285 = vmatpush1.msra.mxu0 0.0
    %286 = vmatprep.subr.mxu0 0.0
    %287 = vmatpush1.msra.mxu0 0.0
    %288 = vmatprep.subr.mxu0 0.0
    %289 = vmatpush1.msra.mxu0 0.0
    %290 = vmatprep.subr.mxu0 0.0
    %291 = vmatpush1.msra.mxu0 0.0
    %292 = vmatprep.subr.mxu0 0.0
    %293 = vmatpush1.msra.mxu0 0.0
    %294 = vmatprep.subr.mxu0 0.0
    %295 = vmatpush1.msra.mxu0 0.0
    %296 = vmatprep.subr.mxu0 0.0
    %297 = vmatpush1.msra.mxu0 0.0
    %298 = vmatprep.subr.mxu0 0.0
    %299 = vmatpush1.msra.mxu0 0.0
    %300 = vmatprep.subr.mxu0 0.0
    %301 = vmatpush1.msra.mxu0 0.0
    %302 = vmatprep.subr.mxu0 0.0
    %303 = vmatpush1.msra.mxu0 0.0
    %304 = vmatprep.subr.mxu0 0.0
    %305 = vmatpush1.msra.mxu0 0.0
    %306 = vmatprep.subr.mxu0 0.0
    %307 = vmatpush1.msra.mxu0 0.0
    %308 = vmatprep.subr.mxu0 0.0
    %309 = vmatpush1.msra.mxu0 0.0
    %310 = vmatprep.subr.mxu0 0.0
    %311 = vmatpush1.msra.mxu0 0.0
    %312 = vmatprep.subr.mxu0 0.0
    %313 = vmatpush1.msra.mxu0 0.0
    %314 = vmatprep.subr.mxu0 0.0
    %315 = vmatpush1.msra.mxu0 0.0
    %316 = vmatprep.subr.mxu0 0.0
    %317 = vmatpush1.msra.mxu0 0.0
    %318 = vmatprep.subr.mxu0 0.0
    %319 = vmatpush1.msra.mxu0 0.0
    %320 = vmatprep.subr.mxu0 0.0
    %321 = vmatpush1.msra.mxu0 0.0
    %322 = vmatprep.subr.mxu0 0.0
    %323 = vmatpush1.msra.mxu0 0.0
    %324 = vmatprep.subr.mxu0 0.0
    %325 = vmatpush1.msra.mxu0 0.0
    %326 = vmatprep.subr.mxu0 0.0
    %327 = vmatpush1.msra.mxu0 0.0
    %328 = vmatprep.subr.mxu0 0.0
    %329 = vmatpush1.msra.mxu0 0.0
    %330 = vmatprep.subr.mxu0 0.0
    %331 = vmatpush1.msra.mxu0 0.0
    %332 = vmatprep.subr.mxu0 0.0
    %333 = vmatpush1.msra.mxu0 0.0
    %334 = vmatprep.subr.mxu0 0.0
    %335 = vmatpush1.msra.mxu0 0.0
    %336 = vmatprep.subr.mxu0 0.0
    %337 = vmatpush1.msra.mxu0 0.0
    %338 = vmatprep.mubr.f32.mxu0 0.0
    %339 = vmatmul.mubr.f32.gmra.mrb[0].mxu0 %v269
    %v340 = vpop.f32.mrb[0].mxu0
    %v341 = vadd.f32 %v267, %v340
    %v342 = vpop.f32.mrb[0].mxu0
    %343 = vmatprep.mubr.f32.mxu0 0.0
    %344 = vmatmul.mubr.f32.gmra.mrb[0].mxu0 %v272
    %v345 = vpop.f32.mrb[0].mxu0
    %v346 = vadd.f32 %v267, %v345
    %v347 = vpop.f32.mrb[0].mxu0
    %348 = vdwg.mxu0
    %vm349 = vcmp.ge.f32.partialorder %v341, 0.0
    %vm350 = vcmp.ge.f32.partialorder %v346, 0.0
    %v351 = vmul.f32 %v341, 0.2
    %v352 = vmul.f32 %v346, 0.2
    %v353 = vsel %vm349, %v341, %v351
    %v354 = vsel %vm350, %v346, %v352
    %v355 = vld [vmem:[%s10 + $0x5] ss:$0 sm:$0xff]
    %v356 = vld [vmem:[%s10 + $0x6] ss:$0 sm:$0xff]
    %v357 = vsel %vm44, %v353, 0.0
    %v358 = vsel %vm44, %v354, 0.0
    %v359 = vadd.f32 %v357, %v358
    %v360 = vrot.slane %v359, 4
    %v361 = vadd.f32 %v359, %v360
    %v362 = vrot.slane %v361, 2
    %v363 = vadd.f32 %v361, %v362
    %v364 = vrot.slane %v363, 1
    %v365 = vadd.f32 %v363, %v364
    %v366 = vmul.f32 %v365, %v240
    %v367 = vsub.f32 %v353, %v366
    %v368 = vsub.f32 %v354, %v366
    %v369 = vmul.f32 %v367, %v367
    %v370 = vmul.f32 %v368, %v368
    %v371 = vsel %vm44, %v369, 0.0
    %v372 = vsel %vm44, %v370, 0.0
    %v373 = vadd.f32 %v371, %v372
    %v374 = vrot.slane %v373, 4
    %v375 = vadd.f32 %v373, %v374
    %v376 = vrot.slane %v375, 2
    %v377 = vadd.f32 %v375, %v376
    %v378 = vrot.slane %v377, 1
    %v379 = vadd.f32 %v377, %v378
    %v380 = vmul.f32 %v379, %v240
    %v381 = vadd.f32 %v380, 1e-05
    %v382 = vrsqrt.pop %v381
    %v383 = vmul.f32 %v367, %v382
    %v384 = vmul.f32 %v368, %v382
    %v385 = vmul.f32 %v383, %v355
    %v386 = vmul.f32 %v384, %v355
    %v387 = vadd.f32 %v385, %v356
    %v388 = vadd.f32 %v386, %v356
    %v389 = vmul.f32 %v47, %v387
    %v390 = vmul.f32 %v50, %v388
    %v391 = vld [vmem:[%s5] sm:$0xff]
    %v392 = vld [vmem:[%s10 + $0x7] ss:$0 sm:$0xff]
    %v394 = vsel %vm44, %v389, 0
    %v397 = vsel %vm44, %v390, 0
    %399 = vmatprep.subr.mxu0 0.0
    %400 = vmatpush1.msra.mxu0 %v391
    %401 = vmatprep.subr.mxu0 0.0
    %402 = vmatpush1.msra.mxu0 0.0
    %403 = vmatprep.subr.mxu0 0.0
    %404 = vmatpush1.msra.mxu0 0.0
    %405 = vmatprep.subr.mxu0 0.0
    %406 = vmatpush1.msra.mxu0 0.0
    %407 = vmatprep.subr.mxu0 0.0
    %408 = vmatpush1.msra.mxu0 0.0
    %409 = vmatprep.subr.mxu0 0.0
    %410 = vmatpush1.msra.mxu0 0.0
    %411 = vmatprep.subr.mxu0 0.0
    %412 = vmatpush1.msra.mxu0 0.0
    %413 = vmatprep.subr.mxu0 0.0
    %414 = vmatpush1.msra.mxu0 0.0
    %415 = vmatprep.subr.mxu0 0.0
    %416 = vmatpush1.msra.mxu0 0.0
    %417 = vmatprep.subr.mxu0 0.0
    %418 = vmatpush1.msra.mxu0 0.0
    %419 = vmatprep.subr.mxu0 0.0
    %420 = vmatpush1.msra.mxu0 0.0
    %421 = vmatprep.subr.mxu0 0.0
    %422 = vmatpush1.msra.mxu0 0.0
    %423 = vmatprep.subr.mxu0 0.0
    %424 = vmatpush1.msra.mxu0 0.0
    %425 = vmatprep.subr.mxu0 0.0
    %426 = vmatpush1.msra.mxu0 0.0
    %427 = vmatprep.subr.mxu0 0.0
    %428 = vmatpush1.msra.mxu0 0.0
    %429 = vmatprep.subr.mxu0 0.0
    %430 = vmatpush1.msra.mxu0 0.0
    %431 = vmatprep.subr.mxu0 0.0
    %432 = vmatpush1.msra.mxu0 0.0
    %433 = vmatprep.subr.mxu0 0.0
    %434 = vmatpush1.msra.mxu0 0.0
    %435 = vmatprep.subr.mxu0 0.0
    %436 = vmatpush1.msra.mxu0 0.0
    %437 = vmatprep.subr.mxu0 0.0
    %438 = vmatpush1.msra.mxu0 0.0
    %439 = vmatprep.subr.mxu0 0.0
    %440 = vmatpush1.msra.mxu0 0.0
    %441 = vmatprep.subr.mxu0 0.0
    %442 = vmatpush1.msra.mxu0 0.0
    %443 = vmatprep.subr.mxu0 0.0
    %444 = vmatpush1.msra.mxu0 0.0
    %445 = vmatprep.subr.mxu0 0.0
    %446 = vmatpush1.msra.mxu0 0.0
    %447 = vmatprep.subr.mxu0 0.0
    %448 = vmatpush1.msra.mxu0 0.0
    %449 = vmatprep.subr.mxu0 0.0
    %450 = vmatpush1.msra.mxu0 0.0
    %451 = vmatprep.subr.mxu0 0.0
    %452 = vmatpush1.msra.mxu0 0.0
    %453 = vmatprep.subr.mxu0 0.0
    %454 = vmatpush1.msra.mxu0 0.0
    %455 = vmatprep.subr.mxu0 0.0
    %456 = vmatpush1.msra.mxu0 0.0
    %457 = vmatprep.subr.mxu0 0.0
    %458 = vmatpush1.msra.mxu0 0.0
    %459 = vmatprep.subr.mxu0 0.0
    %460 = vmatpush1.msra.mxu0 0.0
    %461 = vmatprep.subr.mxu0 0.0
    %462 = vmatpush1.msra.mxu0 0.0
    %463 = vmatprep.mubr.f32.mxu0 0.0
    %464 = vmatmul.mubr.f32.gmra.mrb[0].mxu0 %v394
    %v465 = vpop.f32.mrb[0].mxu0
    %v466 = vadd.f32 %v392, %v465
    %v467 = vpop.f32.mrb[0].mxu0
    %468 = vmatprep.mubr.f32.mxu0 0.0
    %469 = vmatmul.mubr.f32.gmra.mrb[0].mxu0 %v397
    %v470 = vpop.f32.mrb[0].mxu0
    %v471 = vadd.f32 %v392, %v470
    %v472 = vpop.f32.mrb[0].mxu0
    %473 = vdwg.mxu0
    %vm474 = vcmp.ge.f32.partialorder %v466, 0.0
    %vm475 = vcmp.ge.f32.partialorder %v471, 0.0
    %v476 = vmul.f32 %v466, 0.2
    %v477 = vmul.f32 %v471, 0.2
    %v478 = vsel %vm474, %v466, %v476
    %v479 = vsel %vm475, %v471, %v477
    %v480 = vld [vmem:[%s6] sm:$0xff]
    %v481 = vld [vmem:[%s6 + $0x8] sm:$0xff]
    %v482 = vld [vmem:[%s6 + $0x10] sm:$0xff]
    %v483 = vld [vmem:[%s6 + $0x18] sm:$0xff]
    %v484 = vld [vmem:[%s6 + $0x20] sm:$0xff]
    %v485 = vld [vmem:[%s6 + $0x28] sm:$0xff]
    %v486 = vld [vmem:[%s6 + $0x30] sm:$0xff]
    %v487 = vld [vmem:[%s6 + $0x38] sm:$0xff]
    %v488 = vld [vmem:[%s10 + $0x10] ss:$0 sm:$0xff]
    %vm489 = vcmask 523264
    %v491 = vsel %vm489, %v478, 0
    %v494 = vsel %vm489, %v479, 0
    %496 = vmatprep.subr.mxu0 0.0
    %497 = vmatpush1.msra.mxu0 %v480
    %498 = vmatprep.subr.mxu0 0.0
    %499 = vmatpush1.msra.mxu0 %v481
    %500 = vmatprep.subr.mxu0 0.0
    %501 = vmatpush1.msra.mxu0 %v482
    %502 = vmatprep.subr.mxu0 0.0
    %503 = vmatpush1.msra.mxu0 %v483
    %504 = vmatprep.subr.mxu0 0.0
    %505 = vmatpush1.msra.mxu0 %v484
    %506 = vmatprep.subr.mxu0 0.0
    %507 = vmatpush1.msra.mxu0 %v485
    %508 = vmatprep.subr.mxu0 0.0
    %509 = vmatpush1.msra.mxu0 %v486
    %510 = vmatprep.subr.mxu0 0.0
    %511 = vmatpush1.msra.mxu0 %v487
    %512 = vmatprep.subr.mxu0 0.0
    %513 = vmatpush1.msra.mxu0 0.0
    %514 = vmatprep.subr.mxu0 0.0
    %515 = vmatpush1.msra.mxu0 0.0
    %516 = vmatprep.subr.mxu0 0.0
    %517 = vmatpush1.msra.mxu0 0.0
    %518 = vmatprep.subr.mxu0 0.0
    %519 = vmatpush1.msra.mxu0 0.0
    %520 = vmatprep.subr.mxu0 0.0
    %521 = vmatpush1.msra.mxu0 0.0
    %522 = vmatprep.subr.mxu0 0.0
    %523 = vmatpush1.msra.mxu0 0.0
    %524 = vmatprep.subr.mxu0 0.0
    %525 = vmatpush1.msra.mxu0 0.0
    %526 = vmatprep.subr.mxu0 0.0
    %527 = vmatpush1.msra.mxu0 0.0
    %528 = vmatprep.subr.mxu0 0.0
    %529 = vmatpush1.msra.mxu0 0.0
    %530 = vmatprep.subr.mxu0 0.0
    %531 = vmatpush1.msra.mxu0 0.0
    %532 = vmatprep.subr.mxu0 0.0
    %533 = vmatpush1.msra.mxu0 0.0
    %534 = vmatprep.subr.mxu0 0.0
    %535 = vmatpush1.msra.mxu0 0.0
    %536 = vmatprep.subr.mxu0 0.0
    %537 = vmatpush1.msra.mxu0 0.0
    %538 = vmatprep.subr.mxu0 0.0
    %539 = vmatpush1.msra.mxu0 0.0
    %540 = vmatprep.subr.mxu0 0.0
    %541 = vmatpush1.msra.mxu0 0.0
    %542 = vmatprep.subr.mxu0 0.0
    %543 = vmatpush1.msra.mxu0 0.0
    %544 = vmatprep.subr.mxu0 0.0
    %545 = vmatpush1.msra.mxu0 0.0
    %546 = vmatprep.subr.mxu0 0.0
    %547 = vmatpush1.msra.mxu0 0.0
    %548 = vmatprep.subr.mxu0 0.0
    %549 = vmatpush1.msra.mxu0 0.0
    %550 = vmatprep.subr.mxu0 0.0
    %551 = vmatpush1.msra.mxu0 0.0
    %552 = vmatprep.subr.mxu0 0.0
    %553 = vmatpush1.msra.mxu0 0.0
    %554 = vmatprep.subr.mxu0 0.0
    %555 = vmatpush1.msra.mxu0 0.0
    %556 = vmatprep.subr.mxu0 0.0
    %557 = vmatpush1.msra.mxu0 0.0
    %558 = vmatprep.subr.mxu0 0.0
    %559 = vmatpush1.msra.mxu0 0.0
    %560 = vmatprep.mubr.f32.mxu0 0.0
    %561 = vmatmul.mubr.f32.gmra.mrb[0].mxu0 %v491
    %v562 = vpop.f32.mrb[0].mxu0
    %v563 = vadd.f32 %v488, %v562
    %v564 = vpop.f32.mrb[0].mxu0
    %565 = vmatprep.mubr.f32.mxu0 0.0
    %566 = vmatmul.mubr.f32.gmra.mrb[0].mxu0 %v494
    %v567 = vpop.f32.mrb[0].mxu0
    %v568 = vadd.f32 %v488, %v567
    %v569 = vpop.f32.mrb[0].mxu0
    %570 = vdwg.mxu0
    %vm571 = vcmp.ge.f32.partialorder %v563, 0.0
    %vm572 = vcmp.ge.f32.partialorder %v568, 0.0
    %v573 = vmul.f32 %v563, 0.2
    %v574 = vmul.f32 %v568, 0.2
    %v575 = vsel %vm571, %v563, %v573
    %v576 = vsel %vm572, %v568, %v574
    %v577 = vsel %vm44, %v575, 0.0
    %578 = vadd.xlane.f32.xlu0 %v577
    %v579 = vpop.xlane.xlu0 %578
    %v580 = vsel %vm44, %v576, 0.0
    %581 = vadd.xlane.f32.xlu0 %v580
    %v582 = vpop.xlane.xlu0 %581
    %v583 = vadd.f32 %v579, %v582
    %v584 = vmul.f32 %v583, %v240
    %v585 = vsub.f32 %v575, %v584
    %v586 = vsub.f32 %v576, %v584
    %v587 = vmul.f32 %v585, %v585
    %v588 = vmul.f32 %v586, %v586
    %v589 = vsel %vm44, %v587, 0.0
    %590 = vadd.xlane.f32.xlu0 %v589
    %v591 = vpop.xlane.xlu0 %590
    %v592 = vsel %vm44, %v588, 0.0
    %593 = vadd.xlane.f32.xlu0 %v592
    %v594 = vpop.xlane.xlu0 %593
    %v595 = vadd.f32 %v591, %v594
    %v596 = vmul.f32 %v595, %v240
    %v597 = vadd.f32 %v596, 1e-05
    %v598 = vrsqrt.pop %v597
    %v599 = vld [vmem:[%s11] sm:$0xff]
    %v600 = vmul.f32 %v585, %v598
    %v601 = vmul.f32 %v586, %v598
    %603 = vset.pattern.permute.xlu0 0
    %604 = vperm.xlu0 %603, %v599
    %v605 = vpop.permute.xlu0 %604
    %v607 = vmul.f32 %v600, %v605
    %v608 = vmul.f32 %v601, %v605
    %609 = vset.pattern.permute.xlu0 1
    %610 = vperm.xlu0 %609, %v599
    %v611 = vpop.permute.xlu0 %610
    %v613 = vadd.f32 %v607, %v611
    %v614 = vadd.f32 %v608, %v611
    %615 = vst.msk [vmem:[#allocation2] sm:$0xff] %vm44, %v613
    %616 = vst.msk [vmem:[#allocation2 + $0x8] sm:$0xff] %vm44, %v614
    %v617 = vld [vmem:[#allocation2] sm:$0x1]
    %v618 = vld [vmem:[#allocation2 + $0x8] sm:$0x1]
    %v619 = vld [vmem:[#allocation2 + $0x1] sm:$0x1]
    %v620 = vld [vmem:[#allocation2 + $0x9] sm:$0x1]
    %v621 = vld [vmem:[#allocation2 + $0x2] sm:$0x1]
    %v622 = vld [vmem:[#allocation2 + $0xa] sm:$0x1]
    %v623 = vld [vmem:[#allocation2 + $0x3] sm:$0x1]
    %v624 = vld [vmem:[#allocation2 + $0xb] sm:$0x1]
    %v625 = vld [vmem:[#allocation2 + $0x4] sm:$0x1]
    %v626 = vld [vmem:[#allocation2 + $0xc] sm:$0x1]
    %v627 = vld [vmem:[#allocation2 + $0x5] sm:$0x1]
    %v628 = vld [vmem:[#allocation2 + $0xd] sm:$0x1]
    %v629 = vld [vmem:[#allocation2 + $0x6] sm:$0x1]
    %v630 = vld [vmem:[#allocation2 + $0xe] sm:$0x1]
    %v631 = vld [vmem:[#allocation2 + $0x7] sm:$0x1]
    %v632 = vld [vmem:[#allocation2 + $0xf] sm:$0x1]
    %v635 = vrot.slane %v618, 7
    %vm636 = vcmask 1041409
    %v637 = vsel %vm636, %v635, %v617
    %v641 = vrot.slane %v620, 7
    %v642 = vsel %vm636, %v641, %v619
    %643 = vrot.lane.b32.xlu0 %v642, 8
    %v644 = vpop.permute.xlu0 %643
    %v648 = vrot.slane %v622, 7
    %v649 = vsel %vm636, %v648, %v621
    %650 = vrot.lane.b32.xlu0 %v649, 16
    %v651 = vpop.permute.xlu0 %650
    %v655 = vrot.slane %v624, 7
    %v656 = vsel %vm636, %v655, %v623
    %657 = vrot.lane.b32.xlu0 %v656, 24
    %v658 = vpop.permute.xlu0 %657
    %v662 = vrot.slane %v626, 7
    %v663 = vsel %vm636, %v662, %v625
    %664 = vrot.lane.b32.xlu0 %v663, 32
    %v665 = vpop.permute.xlu0 %664
    %v669 = vrot.slane %v628, 7
    %v670 = vsel %vm636, %v669, %v627
    %671 = vrot.lane.b32.xlu0 %v670, 40
    %v672 = vpop.permute.xlu0 %671
    %v676 = vrot.slane %v630, 7
    %v677 = vsel %vm636, %v676, %v629
    %678 = vrot.lane.b32.xlu0 %v677, 48
    %v679 = vpop.permute.xlu0 %678
    %v683 = vrot.slane %v632, 7
    %v684 = vsel %vm636, %v683, %v631
    %685 = vrot.lane.b32.xlu0 %v684, 56
    %v686 = vpop.permute.xlu0 %685
    %v688 = vsel %vm44, %v637, %v644
    %v689 = vsel %vm58, %v688, %v651
    %vm690 = vcmask 195584
    %v691 = vsel %vm690, %v689, %v658
    %vm692 = vcmask 261120
    %v693 = vsel %vm692, %v691, %v665
    %vm694 = vcmask 326656
    %v695 = vsel %vm694, %v693, %v672
    %vm696 = vcmask 392192
    %v697 = vsel %vm696, %v695, %v679
    %vm698 = vcmask 457728
    %v699 = vsel %vm698, %v697, %v686
    %v700 = vld [vmem:[%s7] sm:$0xff]
    %v701 = vld [vmem:[%s7 + $0x8] sm:$0xff]
    %v702 = vld [vmem:[%s7 + $0x10] sm:$0xff]
    %v703 = vld [vmem:[%s7 + $0x18] sm:$0xff]
    %v704 = vld [vmem:[%s7 + $0x20] sm:$0xff]
    %v705 = vld [vmem:[%s7 + $0x28] sm:$0xff]
    %v706 = vld [vmem:[%s7 + $0x30] sm:$0xff]
    %v707 = vld [vmem:[%s7 + $0x38] sm:$0xff]
    %v708 = vld [vmem:[%s7 + $0x40] sm:$0xff]
    %v709 = vld [vmem:[%s7 + $0x48] sm:$0xff]
    %v710 = vld [vmem:[%s7 + $0x50] sm:$0xff]
    %v711 = vld [vmem:[%s7 + $0x58] sm:$0xff]
    %v712 = vld [vmem:[%s7 + $0x60] sm:$0xff]
    %v713 = vld [vmem:[%s7 + $0x68] sm:$0xff]
    %v714 = vld [vmem:[%s7 + $0x70] sm:$0xff]
    %v715 = vld [vmem:[%s7 + $0x78] sm:$0xff]
    %s716 = scalar_lea.vmem %s10, 17
    %v717 = vld [vmem:[%s716] ss:$8 sm:$0x3]
    %v719 = vlaneseq
    %v720 = vshrl.u32 %v719, 7
    %v721 = vsub.s32 0, %v720
    %v722 = vrot.slane %v717, %v721
    %v723 = vlaneseq
    %v724 = vshrl.u32 %v723, 7
    %v725 = vsub.s32 1, %v724
    %v726 = vrot.slane %v717, %v725
    %v730 = vsel %vm489, %v699, 0
    %732 = vmatprep.subr.mxu0 %v701
    %733 = vmatpush1.msra.mxu0 %v700
    %734 = vmatprep.subr.mxu0 %v703
    %735 = vmatpush1.msra.mxu0 %v702
    %736 = vmatprep.subr.mxu0 %v705
    %737 = vmatpush1.msra.mxu0 %v704
    %738 = vmatprep.subr.mxu0 %v707
    %739 = vmatpush1.msra.mxu0 %v706
    %740 = vmatprep.subr.mxu0 %v709
    %741 = vmatpush1.msra.mxu0 %v708
    %742 = vmatprep.subr.mxu0 %v711
    %743 = vmatpush1.msra.mxu0 %v710
    %744 = vmatprep.subr.mxu0 %v713
    %745 = vmatpush1.msra.mxu0 %v712
    %746 = vmatprep.subr.mxu0 %v715
    %747 = vmatpush1.msra.mxu0 %v714
    %748 = vmatprep.subr.mxu0 0.0
    %749 = vmatpush1.msra.mxu0 0.0
    %750 = vmatprep.subr.mxu0 0.0
    %751 = vmatpush1.msra.mxu0 0.0
    %752 = vmatprep.subr.mxu0 0.0
    %753 = vmatpush1.msra.mxu0 0.0
    %754 = vmatprep.subr.mxu0 0.0
    %755 = vmatpush1.msra.mxu0 0.0
    %756 = vmatprep.subr.mxu0 0.0
    %757 = vmatpush1.msra.mxu0 0.0
    %758 = vmatprep.subr.mxu0 0.0
    %759 = vmatpush1.msra.mxu0 0.0
    %760 = vmatprep.subr.mxu0 0.0
    %761 = vmatpush1.msra.mxu0 0.0
    %762 = vmatprep.subr.mxu0 0.0
    %763 = vmatpush1.msra.mxu0 0.0
    %764 = vmatprep.subr.mxu0 0.0
    %765 = vmatpush1.msra.mxu0 0.0
    %766 = vmatprep.subr.mxu0 0.0
    %767 = vmatpush1.msra.mxu0 0.0
    %768 = vmatprep.subr.mxu0 0.0
    %769 = vmatpush1.msra.mxu0 0.0
    %770 = vmatprep.subr.mxu0 0.0
    %771 = vmatpush1.msra.mxu0 0.0
    %772 = vmatprep.subr.mxu0 0.0
    %773 = vmatpush1.msra.mxu0 0.0
    %774 = vmatprep.subr.mxu0 0.0
    %775 = vmatpush1.msra.mxu0 0.0
    %776 = vmatprep.subr.mxu0 0.0
    %777 = vmatpush1.msra.mxu0 0.0
    %778 = vmatprep.subr.mxu0 0.0
    %779 = vmatpush1.msra.mxu0 0.0
    %780 = vmatprep.subr.mxu0 0.0
    %781 = vmatpush1.msra.mxu0 0.0
    %782 = vmatprep.subr.mxu0 0.0
    %783 = vmatpush1.msra.mxu0 0.0
    %784 = vmatprep.subr.mxu0 0.0
    %785 = vmatpush1.msra.mxu0 0.0
    %786 = vmatprep.subr.mxu0 0.0
    %787 = vmatpush1.msra.mxu0 0.0
    %788 = vmatprep.subr.mxu0 0.0
    %789 = vmatpush1.msra.mxu0 0.0
    %790 = vmatprep.subr.mxu0 0.0
    %791 = vmatpush1.msra.mxu0 0.0
    %792 = vmatprep.subr.mxu0 0.0
    %793 = vmatpush1.msra.mxu0 0.0
    %794 = vmatprep.subr.mxu0 0.0
    %795 = vmatpush1.msra.mxu0 0.0
    %796 = vmatprep.mubr.f32.mxu0 0.0
    %797 = vmatmul.mubr.f32.gmra.mrb[0].mxu0 %v730
    %v798 = vpop.f32.mrb[0].mxu0
    %v799 = vadd.f32 %v722, %v798
    %v800 = vpop.f32.mrb[0].mxu0
    %v801 = vadd.f32 %v726, %v800
    %802 = vdwg.mxu0
    %vm803 = vcmp.ge.f32.partialorder %v799, 0.0
    %vm804 = vcmp.ge.f32.partialorder %v801, 0.0
    %v805 = vmul.f32 %v799, 0.2
    %v806 = vmul.f32 %v801, 0.2
    %v807 = vsel %vm803, %v799, %v805
    %v808 = vsel %vm804, %v801, %v806
    %v809 = vld [vmem:[%s8] sm:$0xff]
    %v810 = vld [vmem:[%s8 + $0x8] sm:$0xff]
    %v811 = vld [vmem:[%s8 + $0x10] sm:$0xff]
    %v812 = vld [vmem:[%s8 + $0x18] sm:$0xff]
    %v813 = vld [vmem:[%s8 + $0x20] sm:$0xff]
    %v814 = vld [vmem:[%s8 + $0x28] sm:$0xff]
    %v815 = vld [vmem:[%s8 + $0x30] sm:$0xff]
    %v816 = vld [vmem:[%s8 + $0x38] sm:$0xff]
    %v817 = vld [vmem:[%s8 + $0x40] sm:$0xff]
    %v818 = vld [vmem:[%s8 + $0x48] sm:$0xff]
    %v819 = vld [vmem:[%s8 + $0x50] sm:$0xff]
    %v820 = vld [vmem:[%s8 + $0x58] sm:$0xff]
    %v821 = vld [vmem:[%s8 + $0x60] sm:$0xff]
    %v822 = vld [vmem:[%s8 + $0x68] sm:$0xff]
    %v823 = vld [vmem:[%s8 + $0x70] sm:$0xff]
    %v824 = vld [vmem:[%s8 + $0x78] sm:$0xff]
    %v825 = vld [vmem:[%s8 + $0x80] sm:$0xff]
    %v826 = vld [vmem:[%s8 + $0x88] sm:$0xff]
    %v827 = vld [vmem:[%s8 + $0x90] sm:$0xff]
    %v828 = vld [vmem:[%s8 + $0x98] sm:$0xff]
    %v829 = vld [vmem:[%s8 + $0xa0] sm:$0xff]
    %v830 = vld [vmem:[%s8 + $0xa8] sm:$0xff]
    %v831 = vld [vmem:[%s8 + $0xb0] sm:$0xff]
    %v832 = vld [vmem:[%s8 + $0xb8] sm:$0xff]
    %v833 = vld [vmem:[%s8 + $0xc0] sm:$0xff]
    %v834 = vld [vmem:[%s8 + $0xc8] sm:$0xff]
    %v835 = vld [vmem:[%s8 + $0xd0] sm:$0xff]
    %v836 = vld [vmem:[%s8 + $0xd8] sm:$0xff]
    %v837 = vld [vmem:[%s8 + $0xe0] sm:$0xff]
    %v838 = vld [vmem:[%s8 + $0xe8] sm:$0xff]
    %v839 = vld [vmem:[%s8 + $0xf0] sm:$0xff]
    %v840 = vld [vmem:[%s8 + $0xf8] sm:$0xff]
    %v841 = vld [vmem:[%s10 + $0x12] ss:$0 sm:$0xff]
    %842 = vmatprep.subr.mxu0 0.0
    %843 = vmatpush1.msra.mxu0 %v809
    %844 = vmatprep.subr.mxu0 0.0
    %845 = vmatpush1.msra.mxu0 %v810
    %846 = vmatprep.subr.mxu0 0.0
    %847 = vmatpush1.msra.mxu0 %v811
    %848 = vmatprep.subr.mxu0 0.0
    %849 = vmatpush1.msra.mxu0 %v812
    %850 = vmatprep.subr.mxu0 0.0
    %851 = vmatpush1.msra.mxu0 %v813
    %852 = vmatprep.subr.mxu0 0.0
    %853 = vmatpush1.msra.mxu0 %v814
    %854 = vmatprep.subr.mxu0 0.0
    %855 = vmatpush1.msra.mxu0 %v815
    %856 = vmatprep.subr.mxu0 0.0
    %857 = vmatpush1.msra.mxu0 %v816
    %858 = vmatprep.subr.mxu0 0.0
    %859 = vmatpush1.msra.mxu0 %v817
    %860 = vmatprep.subr.mxu0 0.0
    %861 = vmatpush1.msra.mxu0 %v818
    %862 = vmatprep.subr.mxu0 0.0
    %863 = vmatpush1.msra.mxu0 %v819
    %864 = vmatprep.subr.mxu0 0.0
    %865 = vmatpush1.msra.mxu0 %v820
    %866 = vmatprep.subr.mxu0 0.0
    %867 = vmatpush1.msra.mxu0 %v821
    %868 = vmatprep.subr.mxu0 0.0
    %869 = vmatpush1.msra.mxu0 %v822
    %870 = vmatprep.subr.mxu0 0.0
    %871 = vmatpush1.msra.mxu0 %v823
    %872 = vmatprep.subr.mxu0 0.0
    %873 = vmatpush1.msra.mxu0 %v824
    %874 = vmatprep.subr.mxu0 0.0
    %875 = vmatpush1.msra.mxu0 %v825
    %876 = vmatprep.subr.mxu0 0.0
    %877 = vmatpush1.msra.mxu0 %v826
    %878 = vmatprep.subr.mxu0 0.0
    %879 = vmatpush1.msra.mxu0 %v827
    %880 = vmatprep.subr.mxu0 0.0
    %881 = vmatpush1.msra.mxu0 %v828
    %882 = vmatprep.subr.mxu0 0.0
    %883 = vmatpush1.msra.mxu0 %v829
    %884 = vmatprep.subr.mxu0 0.0
    %885 = vmatpush1.msra.mxu0 %v830
    %886 = vmatprep.subr.mxu0 0.0
    %887 = vmatpush1.msra.mxu0 %v831
    %888 = vmatprep.subr.mxu0 0.0
    %889 = vmatpush1.msra.mxu0 %v832
    %890 = vmatprep.subr.mxu0 0.0
    %891 = vmatpush1.msra.mxu0 %v833
    %892 = vmatprep.subr.mxu0 0.0
    %893 = vmatpush1.msra.mxu0 %v834
    %894 = vmatprep.subr.mxu0 0.0
    %895 = vmatpush1.msra.mxu0 %v835
    %896 = vmatprep.subr.mxu0 0.0
    %897 = vmatpush1.msra.mxu0 %v836
    %898 = vmatprep.subr.mxu0 0.0
    %899 = vmatpush1.msra.mxu0 %v837
    %900 = vmatprep.subr.mxu0 0.0
    %901 = vmatpush1.msra.mxu0 %v838
    %902 = vmatprep.subr.mxu0 0.0
    %903 = vmatpush1.msra.mxu0 %v839
    %904 = vmatprep.subr.mxu0 0.0
    %905 = vmatpush1.msra.mxu0 %v840
    %906 = vmatprep.mubr.f32.mxu0 %v808
    %907 = vmatmul.mubr.f32.gmra.mrb[0].mxu0 %v807
    %v908 = vpop.f32.mrb[0].mxu0
    %v909 = vadd.f32 %v841, %v908
    %v910 = vpop.f32.mrb[0].mxu0
    %911 = vdwg.mxu0
    %vm912 = vcmp.ge.f32.partialorder %v909, 0.0
    %v913 = vmul.f32 %v909, 0.2
    %v914 = vsel %vm912, %v909, %v913
    %v915 = vld [vmem:[%s9] sm:$0xff]
    %v916 = vld [vmem:[%s9 + $0x8] sm:$0xff]
    %v917 = vld [vmem:[%s9 + $0x10] sm:$0xff]
    %v918 = vld [vmem:[%s9 + $0x18] sm:$0xff]
    %v919 = vld [vmem:[%s10 + $0x13] ss:$0 sm:$0xff]
    %v921 = vsel %vm692, %v914, 0
    %923 = vmatprep.subr.mxu0 0.0
    %924 = vmatpush1.msra.mxu0 %v915
    %925 = vmatprep.subr.mxu0 0.0
    %926 = vmatpush1.msra.mxu0 %v916
    %927 = vmatprep.subr.mxu0 0.0
    %928 = vmatpush1.msra.mxu0 %v917
    %929 = vmatprep.subr.mxu0 0.0
    %930 = vmatpush1.msra.mxu0 %v918
    %931 = vmatprep.subr.mxu0 0.0
    %932 = vmatpush1.msra.mxu0 0.0
    %933 = vmatprep.subr.mxu0 0.0
    %934 = vmatpush1.msra.mxu0 0.0
    %935 = vmatprep.subr.mxu0 0.0
    %936 = vmatpush1.msra.mxu0 0.0
    %937 = vmatprep.subr.mxu0 0.0
    %938 = vmatpush1.msra.mxu0 0.0
    %939 = vmatprep.subr.mxu0 0.0
    %940 = vmatpush1.msra.mxu0 0.0
    %941 = vmatprep.subr.mxu0 0.0
    %942 = vmatpush1.msra.mxu0 0.0
    %943 = vmatprep.subr.mxu0 0.0
    %944 = vmatpush1.msra.mxu0 0.0
    %945 = vmatprep.subr.mxu0 0.0
    %946 = vmatpush1.msra.mxu0 0.0
    %947 = vmatprep.subr.mxu0 0.0
    %948 = vmatpush1.msra.mxu0 0.0
    %949 = vmatprep.subr.mxu0 0.0
    %950 = vmatpush1.msra.mxu0 0.0
    %951 = vmatprep.subr.mxu0 0.0
    %952 = vmatpush1.msra.mxu0 0.0
    %953 = vmatprep.subr.mxu0 0.0
    %954 = vmatpush1.msra.mxu0 0.0
    %955 = vmatprep.subr.mxu0 0.0
    %956 = vmatpush1.msra.mxu0 0.0
    %957 = vmatprep.subr.mxu0 0.0
    %958 = vmatpush1.msra.mxu0 0.0
    %959 = vmatprep.subr.mxu0 0.0
    %960 = vmatpush1.msra.mxu0 0.0
    %961 = vmatprep.subr.mxu0 0.0
    %962 = vmatpush1.msra.mxu0 0.0
    %963 = vmatprep.subr.mxu0 0.0
    %964 = vmatpush1.msra.mxu0 0.0
    %965 = vmatprep.subr.mxu0 0.0
    %966 = vmatpush1.msra.mxu0 0.0
    %967 = vmatprep.subr.mxu0 0.0
    %968 = vmatpush1.msra.mxu0 0.0
    %969 = vmatprep.subr.mxu0 0.0
    %970 = vmatpush1.msra.mxu0 0.0
    %971 = vmatprep.subr.mxu0 0.0
    %972 = vmatpush1.msra.mxu0 0.0
    %973 = vmatprep.subr.mxu0 0.0
    %974 = vmatpush1.msra.mxu0 0.0
    %975 = vmatprep.subr.mxu0 0.0
    %976 = vmatpush1.msra.mxu0 0.0
    %977 = vmatprep.subr.mxu0 0.0
    %978 = vmatpush1.msra.mxu0 0.0
    %979 = vmatprep.subr.mxu0 0.0
    %980 = vmatpush1.msra.mxu0 0.0
    %981 = vmatprep.subr.mxu0 0.0
    %982 = vmatpush1.msra.mxu0 0.0
    %983 = vmatprep.subr.mxu0 0.0
    %984 = vmatpush1.msra.mxu0 0.0
    %985 = vmatprep.subr.mxu0 0.0
    %986 = vmatpush1.msra.mxu0 0.0
    %987 = vmatprep.mubr.f32.mxu0 0.0
    %988 = vmatmul.mubr.f32.gmra.mrb[0].mxu0 %v921
    %v989 = vpop.f32.mrb[0].mxu0
    %v990 = vadd.f32 %v919, %v989
    %v991 = vpop.f32.mrb[0].mxu0
    %992 = vdwg.mxu0
    %vm993 = vcmask 9216
    %994 = vst.msk [vmem:[#allocation3] sm:$0x3] %vm993, %v990
    // Predicated region
    $region50: #{tpu_custom_call.1} parent=1 // pred_check
      _
    $region51: #{tpu_custom_call.1} parent=1 // pred_check_branch
      %996 = sbr.rel (0) target = $region53
    $region52: #{tpu_custom_call.1} parent=1 // pred_region
      %s998 = ssub.s32 32, 32
      %999 = vsyncadd [#allocation4], %s998
      %s1001 = sshll.u32 [#allocation3], 4
      %s1002 = int_to_ptr.vmem [resolvable:$true] %s1001
      %1004 = dma.vmem_to_hbm [thread:$0]  %s1002, 32, %s12, [#allocation4]
    $region53: #{tpu_custom_call.1} parent=1 // pred_fallthru
      _
    // Predicated region
    $region54: #{tpu_custom_call.1} parent=1 // pred_check
      _
    $region55: #{tpu_custom_call.1} parent=1 // pred_check_branch
      %1006 = sbr.rel (0) target = $region57
    $region56: #{tpu_custom_call.1} parent=1 // pred_region
      %1007 = dma.done [#allocation4], 32
    $region57: #{tpu_custom_call.1} parent=1 // pred_fallthru
      _
    %1008 = vsyncpa [#allocation4], 1

</llo_original>
